<compile_context>
chip_gen: v7x
topology: tpu7x:2x2x1
jax: 0.10.0
libtpu: 0.0.40
codegen_flags: <defaults>
</compile_context>

<pallas_src>
import functools

import jax
import jax.numpy as jnp
from jax.experimental import pallas as pl
from jax.experimental.pallas import tpu as pltpu

LANE = 128
SUBLANE = 8


def _to_slab(x, tile_rows):
    """Flatten `x` into a (rows, 128) slab, rows a multiple of a sublane-aligned
    tile. Returns (slab, tile_rows_used, n_valid_elements)."""
    flat = x.reshape(-1)
    n = flat.shape[0]
    # rows needed for n elements, rounded up to a sublane multiple
    rows0 = SUBLANE * pl.cdiv(max(n, 1), SUBLANE * LANE)
    # clamp requested tile to the data size; keep it a multiple of 8 sublanes
    tr = max(SUBLANE, (min(tile_rows, rows0) // SUBLANE) * SUBLANE)
    rows = tr * pl.cdiv(rows0, tr)
    pad = rows * LANE - n
    if pad:  # single copy, only for awkward sizes
        flat = jnp.pad(flat, (0, pad))
    return flat.reshape(rows, LANE), tr, n


def _sq_err_partial_kernel(x_ref, t_ref, out_ref):
    # Hot path: 2 vector loads + VPU sub/mul, then fold sublane groups with
    # elementwise adds into a single (8, 128) partial -- no per-tile cross-lane
    # reduction, no scalar round trip.
    d = x_ref[...].astype(jnp.float32) - t_ref[...].astype(jnp.float32)
    dd = d * d
    out_ref[...] = jnp.sum(dd.reshape(-1, SUBLANE, LANE), axis=0)


def _kl_partial_kernel(mu_ref, lv_ref, out_ref):
    mu = mu_ref[...].astype(jnp.float32)
    lv = lv_ref[...].astype(jnp.float32)
    # zero padding contributes 1 + 0 - 0 - exp(0) = 0, so a plain sum is exact
    term = 1.0 + lv - mu * mu - jnp.exp(lv)
    out_ref[...] = jnp.sum(term.reshape(-1, SUBLANE, LANE), axis=0)


def _vmem_limit_bytes(tile_rows):
    # 2 inputs x 2 pipeline buffers x tile bytes (+ output partials / slack).
    need = 2 * 2 * tile_rows * LANE * 4 + (1 << 20)
    # Leave headroom for v7x (64 MiB physical VMEM per TC).
    return int(min(max(2 * need, 16 << 20), 40 << 20))


def _block_partial_sums(kernel, a2d, b2d, tile_rows):
    rows = a2d.shape[0]
    nb = rows // tile_rows
    return pl.pallas_call(
        kernel,
        out_shape=jax.ShapeDtypeStruct((nb * SUBLANE, LANE), jnp.float32),
        grid_spec=pltpu.PrefetchScalarGridSpec(
            num_scalar_prefetch=0,
            grid=(nb,),
            in_specs=[
                pl.BlockSpec((tile_rows, LANE), lambda i: (i, 0)),
                pl.BlockSpec((tile_rows, LANE), lambda i: (i, 0)),
            ],
            out_specs=pl.BlockSpec((SUBLANE, LANE), lambda i: (i, 0)),
        ),
        compiler_params=pltpu.CompilerParams(
            dimension_semantics=("parallel",),
            vmem_limit_bytes=_vmem_limit_bytes(tile_rows),
        ),
    )(a2d, b2d)


@functools.partial(jax.jit, static_argnames=("tile_rows",))
def custom_loss(inputs, targets, mu, logvar, *, tile_rows=2048):
    """CustomLoss.forward: mean((x-t)^2) - 0.5*mean(1 + lv - mu^2 - exp(lv))."""
    x2d, tr_x, n_mse = _to_slab(inputs, tile_rows)
    t2d, _, _ = _to_slab(targets, tile_rows)
    mu2d, tr_l, n_kl = _to_slab(mu, tile_rows)
    lv2d, _, _ = _to_slab(logvar, tile_rows)

    mse_parts = _block_partial_sums(_sq_err_partial_kernel, x2d, t2d, tr_x)
    kl_parts = _block_partial_sums(_kl_partial_kernel, mu2d, lv2d, tr_l)

    # Tiny final reductions of the per-block partial slabs + mean/scale.
    mse = jnp.sum(mse_parts) / jnp.float32(n_mse)
    kl = -0.5 * (jnp.sum(kl_parts) / jnp.float32(n_kl))
    return mse + kl


def custom_loss_ref(inputs, targets, mu, logvar):
    mse = jnp.mean((inputs.astype(jnp.float32) - targets.astype(jnp.float32)) ** 2)
    kl = -0.5 * jnp.mean(1.0 + logvar - mu**2 - jnp.exp(logvar))
    return mse + kl


if __name__ == "__main__":
    key = jax.random.PRNGKey(0)
    k1, k2, k3, k4 = jax.random.split(key, 4)

    # Small shapes consistent with a 3D-UNet VAE: reconstruction volumes + latent stats
    inputs = jax.random.normal(k1, (2, 4, 16, 16, 16), jnp.float32)   # NCDHW
    targets = jax.random.normal(k2, (2, 4, 16, 16, 16), jnp.float32)
    mu = jax.random.normal(k3, (2, 128), jnp.float32)
    logvar = 0.1 * jax.random.normal(k4, (2, 128), jnp.float32)

    loss = custom_loss(inputs, targets, mu, logvar)
    jax.block_until_ready(loss)

    ref = custom_loss_ref(inputs, targets, mu, logvar)
    assert jnp.allclose(loss, ref, rtol=1e-5, atol=1e-5), (loss, ref)

    print("KERNEL_OK")
</pallas_src>

<mosaic_0001>
module attributes {stable_mosaic.version = 11 : i64} {
  func.func @_sq_err_partial_kernel(%arg0: i32, %arg1: memref<256x128xf32, #tpu.memory_space<vmem>>, %arg2: memref<256x128xf32, #tpu.memory_space<vmem>>, %arg3: memref<8x128xf32, #tpu.memory_space<vmem>>) attributes {dimension_semantics = [#tpu.dimension_semantics<parallel>], iteration_bounds = array<i64: 1>, scalar_prefetch = 0 : i64, scratch_operands = 0 : i64, tpu.core_type = #tpu.core_type<tc>, window_params = [{transform_indices = @transform_0, window_bounds = array<i64: 256, 128>}, {transform_indices = @transform_1, window_bounds = array<i64: 256, 128>}, {transform_indices = @transform_2, window_bounds = array<i64: 8, 128>}]} {
    %c0 = arith.constant 0 : index
    %c0_0 = arith.constant 0 : index
    %0 = vector.load %arg1[%c0, %c0_0] : memref<256x128xf32, #tpu.memory_space<vmem>>, vector<256x128xf32>
    %c0_1 = arith.constant 0 : index
    %c0_2 = arith.constant 0 : index
    %1 = vector.load %arg2[%c0_1, %c0_2] : memref<256x128xf32, #tpu.memory_space<vmem>>, vector<256x128xf32>
    %2 = arith.subf %0, %1 : vector<256x128xf32>
    %3 = arith.mulf %2, %2 : vector<256x128xf32>
    %4 = vector.shape_cast %3 : vector<256x128xf32> to vector<32x8x128xf32>
    %cst = arith.constant dense<0.000000e+00> : vector<8x128xf32>
    %5 = vector.multi_reduction <add>, %4, %cst [0] : vector<32x8x128xf32> to vector<8x128xf32>
    %c0_3 = arith.constant 0 : index
    %c0_4 = arith.constant 0 : index
    %6 = vector.load %arg3[%c0_3, %c0_4] : memref<8x128xf32, #tpu.memory_space<vmem>>, vector<8x128xf32>
    tpu.vector_store %arg3[%c0_3, %c0_4], %5 {strides = array<i32>} : memref<8x128xf32, #tpu.memory_space<vmem>>, vector<8x128xf32>,
    return
  }
  func.func @transform_0(%arg0: i32) -> (i32, i32) {
    %c0_i32 = arith.constant 0 : i32
    %c0_i32_0 = arith.constant 0 : i32
    return %arg0, %c0_i32 : i32, i32
  }
  func.func @transform_1(%arg0: i32) -> (i32, i32) {
    %c0_i32 = arith.constant 0 : i32
    %c0_i32_0 = arith.constant 0 : i32
    return %arg0, %c0_i32 : i32, i32
  }
  func.func @transform_2(%arg0: i32) -> (i32, i32) {
    %c0_i32 = arith.constant 0 : i32
    %c0_i32_0 = arith.constant 0 : i32
    return %arg0, %c0_i32 : i32, i32
  }
}

module attributes {stable_mosaic.version = 11 : i64} {
  func.func @_kl_partial_kernel(%arg0: i32, %arg1: memref<8x128xf32, #tpu.memory_space<vmem>>, %arg2: memref<8x128xf32, #tpu.memory_space<vmem>>, %arg3: memref<8x128xf32, #tpu.memory_space<vmem>>) attributes {dimension_semantics = [#tpu.dimension_semantics<parallel>], iteration_bounds = array<i64: 1>, scalar_prefetch = 0 : i64, scratch_operands = 0 : i64, tpu.core_type = #tpu.core_type<tc>, window_params = [{transform_indices = @transform_0, window_bounds = array<i64: 8, 128>}, {transform_indices = @transform_1, window_bounds = array<i64: 8, 128>}, {transform_indices = @transform_2, window_bounds = array<i64: 8, 128>}]} {
    %c0 = arith.constant 0 : index
    %c0_0 = arith.constant 0 : index
    %0 = vector.load %arg1[%c0, %c0_0] : memref<8x128xf32, #tpu.memory_space<vmem>>, vector<8x128xf32>
    %c0_1 = arith.constant 0 : index
    %c0_2 = arith.constant 0 : index
    %1 = vector.load %arg2[%c0_1, %c0_2] : memref<8x128xf32, #tpu.memory_space<vmem>>, vector<8x128xf32>
    %cst = arith.constant 1.000000e+00 : f32
    %2 = vector.broadcast %cst : f32 to vector<8x128xf32>
    %3 = arith.addf %2, %1 : vector<8x128xf32>
    %4 = arith.mulf %0, %0 : vector<8x128xf32>
    %5 = arith.subf %3, %4 : vector<8x128xf32>
    %6 = math.exp %1 : vector<8x128xf32>
    %7 = arith.subf %5, %6 : vector<8x128xf32>
    %8 = vector.shape_cast %7 : vector<8x128xf32> to vector<1x8x128xf32>
    %cst_3 = arith.constant dense<0.000000e+00> : vector<8x128xf32>
    %9 = vector.multi_reduction <add>, %8, %cst_3 [0] : vector<1x8x128xf32> to vector<8x128xf32>
    %c0_4 = arith.constant 0 : index
    %c0_5 = arith.constant 0 : index
    %10 = vector.load %arg3[%c0_4, %c0_5] : memref<8x128xf32, #tpu.memory_space<vmem>>, vector<8x128xf32>
    tpu.vector_store %arg3[%c0_4, %c0_5], %9 {strides = array<i32>} : memref<8x128xf32, #tpu.memory_space<vmem>>, vector<8x128xf32>,
    return
  }
  func.func @transform_0(%arg0: i32) -> (i32, i32) {
    %c0_i32 = arith.constant 0 : i32
    %c0_i32_0 = arith.constant 0 : i32
    return %arg0, %c0_i32 : i32, i32
  }
  func.func @transform_1(%arg0: i32) -> (i32, i32) {
    %c0_i32 = arith.constant 0 : i32
    %c0_i32_0 = arith.constant 0 : i32
    return %arg0, %c0_i32 : i32, i32
  }
  func.func @transform_2(%arg0: i32) -> (i32, i32) {
    %c0_i32 = arith.constant 0 : i32
    %c0_i32_0 = arith.constant 0 : i32
    return %arg0, %c0_i32 : i32, i32
  }
}

</mosaic_0001>

<llo_original>
// kernel: custom_loss.3
$region0: #{custom_loss.3}
  #allocation0 [shape = 'u32[]', space=smem, size = 0x4, offset = 0x4, fixed_abs, tag = 'smem constant byte address 0x4 - core index']
  #allocation1 [shape = 'u32[144,128]{1,0:T(1,128)}', space=vmem, size = 0x12000, scoped, tag = 'internal scratch']
  %s0 = inlined_call_operand.vmem [shape: f32[8,128], index: 0, kind: input, shape index: {}]
  %s1 = inlined_call_operand.vmem [shape: f32[8,128], index: 1, kind: input, shape index: {}]
  %s2 = inlined_call_operand.vmem [shape: f32[8,128], index: 2, kind: output, shape index: {}]
  %s3 = sld [smem:[#allocation0]]
  $region18: #{custom_loss.3} parent=0
    _
  %s5 = ssub.s32 1, %s3
  %s6 = scalar_select 0, %s5, %s3
  // Predicated region
  $region2: #{custom_loss.3} parent=0 // pred_check
    _
  $region3: #{custom_loss.3} parent=0 // pred_check_branch
    %8 = sbr.rel (0) target = $region5
  $region4: #{custom_loss.3} parent=0 // pred_region
    _
  $region5: #{custom_loss.3} parent=0 // pred_fallthru
    _
  // Predicated region
  $region6: #{custom_loss.3} parent=0 // pred_check
    _
  $region7: #{custom_loss.3} parent=0 // pred_check_branch
    %10 = sbr.rel (0) target = $region9
  $region8: #{custom_loss.3} parent=0 // pred_region
    _
  $region9: #{custom_loss.3} parent=0 // pred_fallthru
    _
  %v11 = vld [vmem:[%s0] sm:$0xff]
  %v12 = vld [vmem:[%s1] sm:$0xff]
  %v13 = vadd.f32 %v12, 1.0
  %v14 = vmul.f32 %v11, %v11
  %v15 = vsub.f32 %v13, %v14
  %v16 = vmul.f32 %v12, 1.442695
  %v17 = vpow.pop %v16
  %v18 = vsub.f32 %v15, %v17
  %v19 = vadd.f32 %v18, 0.0
  %20 = vst [vmem:[%s2] sm:$0xff] %v19
  // Predicated region
  $region10: #{custom_loss.3} parent=0 // pred_check
    _
  $region11: #{custom_loss.3} parent=0 // pred_check_branch
    %22 = sbr.rel (0) target = $region13
  $region12: #{custom_loss.3} parent=0 // pred_region
    _
  $region13: #{custom_loss.3} parent=0 // pred_fallthru
    _
  // Predicated region
  $region14: #{custom_loss.3} parent=0 // pred_check
    _
  $region15: #{custom_loss.3} parent=0 // pred_check_branch
    %24 = sbr.rel (0) target = $region17
  $region16: #{custom_loss.3} parent=0 // pred_region
    _
  $region17: #{custom_loss.3} parent=0 // pred_fallthru
    _

// kernel: custom_loss.2
$region0: #{custom_loss.2}
  #allocation0 [shape = 'u32[]', space=smem, size = 0x4, offset = 0x4, fixed_abs, tag = 'smem constant byte address 0x4 - core index']
  #allocation1 [shape = 'u32[144,128]{1,0:T(1,128)}', space=vmem, size = 0x12000, scoped, tag = 'internal scratch']
  %s0 = inlined_call_operand.vmem [shape: f32[256,128], index: 0, kind: input, shape index: {}]
  %s1 = inlined_call_operand.vmem [shape: f32[256,128], index: 1, kind: input, shape index: {}]
  %s2 = inlined_call_operand.vmem [shape: f32[8,128], index: 2, kind: output, shape index: {}]
  %s3 = sld [smem:[#allocation0]]
  $region18: #{custom_loss.2} parent=0
    _
  %s5 = ssub.s32 1, %s3
  %s6 = scalar_select 0, %s5, %s3
  // Predicated region
  $region2: #{custom_loss.2} parent=0 // pred_check
    _
  $region3: #{custom_loss.2} parent=0 // pred_check_branch
    %8 = sbr.rel (0) target = $region5
  $region4: #{custom_loss.2} parent=0 // pred_region
    _
  $region5: #{custom_loss.2} parent=0 // pred_fallthru
    _
  // Predicated region
  $region6: #{custom_loss.2} parent=0 // pred_check
    _
  $region7: #{custom_loss.2} parent=0 // pred_check_branch
    %10 = sbr.rel (0) target = $region9
  $region8: #{custom_loss.2} parent=0 // pred_region
    _
  $region9: #{custom_loss.2} parent=0 // pred_fallthru
    _
  %v11 = vld [vmem:[%s0] sm:$0xff]
  %v12 = vld [vmem:[%s0 + $0x8] sm:$0xff]
  %v13 = vld [vmem:[%s0 + $0x10] sm:$0xff]
  %v14 = vld [vmem:[%s0 + $0x18] sm:$0xff]
  %v15 = vld [vmem:[%s0 + $0x20] sm:$0xff]
  %v16 = vld [vmem:[%s0 + $0x28] sm:$0xff]
  %v17 = vld [vmem:[%s0 + $0x30] sm:$0xff]
  %v18 = vld [vmem:[%s0 + $0x38] sm:$0xff]
  %v19 = vld [vmem:[%s0 + $0x40] sm:$0xff]
  %v20 = vld [vmem:[%s0 + $0x48] sm:$0xff]
  %v21 = vld [vmem:[%s0 + $0x50] sm:$0xff]
  %v22 = vld [vmem:[%s0 + $0x58] sm:$0xff]
  %v23 = vld [vmem:[%s0 + $0x60] sm:$0xff]
  %v24 = vld [vmem:[%s0 + $0x68] sm:$0xff]
  %v25 = vld [vmem:[%s0 + $0x70] sm:$0xff]
  %v26 = vld [vmem:[%s0 + $0x78] sm:$0xff]
  %v27 = vld [vmem:[%s0 + $0x80] sm:$0xff]
  %v28 = vld [vmem:[%s0 + $0x88] sm:$0xff]
  %v29 = vld [vmem:[%s0 + $0x90] sm:$0xff]
  %v30 = vld [vmem:[%s0 + $0x98] sm:$0xff]
  %v31 = vld [vmem:[%s0 + $0xa0] sm:$0xff]
  %v32 = vld [vmem:[%s0 + $0xa8] sm:$0xff]
  %v33 = vld [vmem:[%s0 + $0xb0] sm:$0xff]
  %v34 = vld [vmem:[%s0 + $0xb8] sm:$0xff]
  %v35 = vld [vmem:[%s0 + $0xc0] sm:$0xff]
  %v36 = vld [vmem:[%s0 + $0xc8] sm:$0xff]
  %v37 = vld [vmem:[%s0 + $0xd0] sm:$0xff]
  %v38 = vld [vmem:[%s0 + $0xd8] sm:$0xff]
  %v39 = vld [vmem:[%s0 + $0xe0] sm:$0xff]
  %v40 = vld [vmem:[%s0 + $0xe8] sm:$0xff]
  %v41 = vld [vmem:[%s0 + $0xf0] sm:$0xff]
  %v42 = vld [vmem:[%s0 + $0xf8] sm:$0xff]
  %v43 = vld [vmem:[%s1] sm:$0xff]
  %v44 = vld [vmem:[%s1 + $0x8] sm:$0xff]
  %v45 = vld [vmem:[%s1 + $0x10] sm:$0xff]
  %v46 = vld [vmem:[%s1 + $0x18] sm:$0xff]
  %v47 = vld [vmem:[%s1 + $0x20] sm:$0xff]
  %v48 = vld [vmem:[%s1 + $0x28] sm:$0xff]
  %v49 = vld [vmem:[%s1 + $0x30] sm:$0xff]
  %v50 = vld [vmem:[%s1 + $0x38] sm:$0xff]
  %v51 = vld [vmem:[%s1 + $0x40] sm:$0xff]
  %v52 = vld [vmem:[%s1 + $0x48] sm:$0xff]
  %v53 = vld [vmem:[%s1 + $0x50] sm:$0xff]
  %v54 = vld [vmem:[%s1 + $0x58] sm:$0xff]
  %v55 = vld [vmem:[%s1 + $0x60] sm:$0xff]
  %v56 = vld [vmem:[%s1 + $0x68] sm:$0xff]
  %v57 = vld [vmem:[%s1 + $0x70] sm:$0xff]
  %v58 = vld [vmem:[%s1 + $0x78] sm:$0xff]
  %v59 = vld [vmem:[%s1 + $0x80] sm:$0xff]
  %v60 = vld [vmem:[%s1 + $0x88] sm:$0xff]
  %v61 = vld [vmem:[%s1 + $0x90] sm:$0xff]
  %v62 = vld [vmem:[%s1 + $0x98] sm:$0xff]
  %v63 = vld [vmem:[%s1 + $0xa0] sm:$0xff]
  %v64 = vld [vmem:[%s1 + $0xa8] sm:$0xff]
  %v65 = vld [vmem:[%s1 + $0xb0] sm:$0xff]
  %v66 = vld [vmem:[%s1 + $0xb8] sm:$0xff]
  %v67 = vld [vmem:[%s1 + $0xc0] sm:$0xff]
  %v68 = vld [vmem:[%s1 + $0xc8] sm:$0xff]
  %v69 = vld [vmem:[%s1 + $0xd0] sm:$0xff]
  %v70 = vld [vmem:[%s1 + $0xd8] sm:$0xff]
  %v71 = vld [vmem:[%s1 + $0xe0] sm:$0xff]
  %v72 = vld [vmem:[%s1 + $0xe8] sm:$0xff]
  %v73 = vld [vmem:[%s1 + $0xf0] sm:$0xff]
  %v74 = vld [vmem:[%s1 + $0xf8] sm:$0xff]
  %v75 = vsub.f32 %v11, %v43
  %v76 = vsub.f32 %v12, %v44
  %v77 = vsub.f32 %v13, %v45
  %v78 = vsub.f32 %v14, %v46
  %v79 = vsub.f32 %v15, %v47
  %v80 = vsub.f32 %v16, %v48
  %v81 = vsub.f32 %v17, %v49
  %v82 = vsub.f32 %v18, %v50
  %v83 = vsub.f32 %v19, %v51
  %v84 = vsub.f32 %v20, %v52
  %v85 = vsub.f32 %v21, %v53
  %v86 = vsub.f32 %v22, %v54
  %v87 = vsub.f32 %v23, %v55
  %v88 = vsub.f32 %v24, %v56
  %v89 = vsub.f32 %v25, %v57
  %v90 = vsub.f32 %v26, %v58
  %v91 = vsub.f32 %v27, %v59
  %v92 = vsub.f32 %v28, %v60
  %v93 = vsub.f32 %v29, %v61
  %v94 = vsub.f32 %v30, %v62
  %v95 = vsub.f32 %v31, %v63
  %v96 = vsub.f32 %v32, %v64
  %v97 = vsub.f32 %v33, %v65
  %v98 = vsub.f32 %v34, %v66
  %v99 = vsub.f32 %v35, %v67
  %v100 = vsub.f32 %v36, %v68
  %v101 = vsub.f32 %v37, %v69
  %v102 = vsub.f32 %v38, %v70
  %v103 = vsub.f32 %v39, %v71
  %v104 = vsub.f32 %v40, %v72
  %v105 = vsub.f32 %v41, %v73
  %v106 = vsub.f32 %v42, %v74
  %v107 = vmul.f32 %v75, %v75
  %v108 = vmul.f32 %v76, %v76
  %v109 = vmul.f32 %v77, %v77
  %v110 = vmul.f32 %v78, %v78
  %v111 = vmul.f32 %v79, %v79
  %v112 = vmul.f32 %v80, %v80
  %v113 = vmul.f32 %v81, %v81
  %v114 = vmul.f32 %v82, %v82
  %v115 = vmul.f32 %v83, %v83
  %v116 = vmul.f32 %v84, %v84
  %v117 = vmul.f32 %v85, %v85
  %v118 = vmul.f32 %v86, %v86
  %v119 = vmul.f32 %v87, %v87
  %v120 = vmul.f32 %v88, %v88
  %v121 = vmul.f32 %v89, %v89
  %v122 = vmul.f32 %v90, %v90
  %v123 = vmul.f32 %v91, %v91
  %v124 = vmul.f32 %v92, %v92
  %v125 = vmul.f32 %v93, %v93
  %v126 = vmul.f32 %v94, %v94
  %v127 = vmul.f32 %v95, %v95
  %v128 = vmul.f32 %v96, %v96
  %v129 = vmul.f32 %v97, %v97
  %v130 = vmul.f32 %v98, %v98
  %v131 = vmul.f32 %v99, %v99
  %v132 = vmul.f32 %v100, %v100
  %v133 = vmul.f32 %v101, %v101
  %v134 = vmul.f32 %v102, %v102
  %v135 = vmul.f32 %v103, %v103
  %v136 = vmul.f32 %v104, %v104
  %v137 = vmul.f32 %v105, %v105
  %v138 = vmul.f32 %v106, %v106
  %v139 = vadd.f32 %v107, %v108
  %v140 = vadd.f32 %v139, %v109
  %v141 = vadd.f32 %v140, %v110
  %v142 = vadd.f32 %v141, %v111
  %v143 = vadd.f32 %v142, %v112
  %v144 = vadd.f32 %v143, %v113
  %v145 = vadd.f32 %v144, %v114
  %v146 = vadd.f32 %v145, %v115
  %v147 = vadd.f32 %v146, %v116
  %v148 = vadd.f32 %v147, %v117
  %v149 = vadd.f32 %v148, %v118
  %v150 = vadd.f32 %v149, %v119
  %v151 = vadd.f32 %v150, %v120
  %v152 = vadd.f32 %v151, %v121
  %v153 = vadd.f32 %v152, %v122
  %v154 = vadd.f32 %v153, %v123
  %v155 = vadd.f32 %v154, %v124
  %v156 = vadd.f32 %v155, %v125
  %v157 = vadd.f32 %v156, %v126
  %v158 = vadd.f32 %v157, %v127
  %v159 = vadd.f32 %v158, %v128
  %v160 = vadd.f32 %v159, %v129
  %v161 = vadd.f32 %v160, %v130
  %v162 = vadd.f32 %v161, %v131
  %v163 = vadd.f32 %v162, %v132
  %v164 = vadd.f32 %v163, %v133
  %v165 = vadd.f32 %v164, %v134
  %v166 = vadd.f32 %v165, %v135
  %v167 = vadd.f32 %v166, %v136
  %v168 = vadd.f32 %v167, %v137
  %v169 = vadd.f32 %v168, %v138
  %170 = vst [vmem:[%s2] sm:$0xff] %v169
  // Predicated region
  $region10: #{custom_loss.2} parent=0 // pred_check
    _
  $region11: #{custom_loss.2} parent=0 // pred_check_branch
    %172 = sbr.rel (0) target = $region13
  $region12: #{custom_loss.2} parent=0 // pred_region
    _
  $region13: #{custom_loss.2} parent=0 // pred_fallthru
    _
  // Predicated region
  $region14: #{custom_loss.2} parent=0 // pred_check
    _
  $region15: #{custom_loss.2} parent=0 // pred_check_branch
    %174 = sbr.rel (0) target = $region17
  $region16: #{custom_loss.2} parent=0 // pred_region
    _
  $region17: #{custom_loss.2} parent=0 // pred_fallthru
    _

</llo_original>
